<compile_context>
chip_gen: v7x
topology: tpu7x:2x2x1
jax: 0.10.0
libtpu: 0.0.40
codegen_flags: <defaults>
</compile_context>

<pallas_src>
import jax
import jax.numpy as jnp
from jax.experimental import pallas as pl
from jax.experimental.pallas import tpu as pltpu

INPUT_SIZE = 4
HIDDEN_SIZE = 24
OUTPUT_SIZE = 2
OUT_PAD = 128  # lane-dense padded output width (multiple of 128 lanes)


def _round_up(n, m):
    return ((n + m - 1) // m) * m


def dqn_kernel(x_ref, w1_ref, b1_ref, w2_ref, b2_ref, w3_ref, b3_ref, out_ref):
    """One batch tile: (tb, 4) -> (tb, OUT_PAD).

    Weights arrive pre-cast to bf16 (MXU-native on v6e/v7x); only activations
    are cast in-kernel.  Accumulation is explicit f32; bias/ReLU run in f32.
    """
    x = x_ref[...].astype(jnp.bfloat16)                                 # (tb, 4)

    h1 = jnp.dot(x, w1_ref[...], preferred_element_type=jnp.float32)
    h1 = jnp.maximum(h1 + b1_ref[...], 0.0).astype(jnp.bfloat16)        # (tb, 24)

    h2 = jnp.dot(h1, w2_ref[...], preferred_element_type=jnp.float32)
    h2 = jnp.maximum(h2 + b2_ref[...], 0.0).astype(jnp.bfloat16)        # (tb, 24)

    y = jnp.dot(h2, w3_ref[...], preferred_element_type=jnp.float32)    # (tb, 128)
    out_ref[...] = (y + b3_ref[...]).astype(out_ref.dtype)              # lane-dense store


def dqn_forward(x, params, *, block_b=512):
    """Pallas forward pass. x: (B, 4) f32 -> (B, 2) f32."""
    w1, b1, w2, b2, w3, b3 = params
    B = x.shape[0]

    # --- layout prep (once per call, outside the kernel) --------------------
    # Lane-dense output: pad fc3 to OUT_PAD zero columns; slice [:, :2] after.
    w3p = jnp.pad(w3, ((0, 0), (0, OUT_PAD - OUTPUT_SIZE)))
    b3p = jnp.pad(b3, ((0, 0), (0, OUT_PAD - OUTPUT_SIZE)))

    # Hoisted bf16 casts for MXU operands (not re-done per tile).
    w1b = w1.astype(jnp.bfloat16)
    w2b = w2.astype(jnp.bfloat16)
    w3b = w3p.astype(jnp.bfloat16)

    # Batch tile: big enough to amortize per-step grid overhead, small enough
    # that double-buffered padded activations stay well within scoped VMEM.
    tb = min(block_b, _round_up(B, 8))
    Bp = _round_up(B, tb)
    if Bp != B:
        x = jnp.pad(x, ((0, Bp - B), (0, 0)))
    grid = (Bp // tb,)

    # Weights/biases: constant index_map -> resident in VMEM across all tiles.
    def resident(arr):
        return pl.BlockSpec(arr.shape, lambda i: (0,) * arr.ndim,
                            memory_space=pltpu.VMEM)

    out = pl.pallas_call(
        dqn_kernel,
        out_shape=jax.ShapeDtypeStruct((Bp, OUT_PAD), jnp.float32),
        grid=grid,
        in_specs=[
            pl.BlockSpec((tb, INPUT_SIZE), lambda i: (i, 0),
                         memory_space=pltpu.VMEM),
            resident(w1b), resident(b1),
            resident(w2b), resident(b2),
            resident(w3b), resident(b3p),
        ],
        out_specs=pl.BlockSpec((tb, OUT_PAD), lambda i: (i, 0),
                               memory_space=pltpu.VMEM),
        compiler_params=pltpu.CompilerParams(
            dimension_semantics=("parallel",)),  # megacore-shard batch on v7x
    )(x, w1b, b1, w2b, b2, w3b, b3p)

    return out[:B, :OUTPUT_SIZE]


def init_params(key):
    """Deterministic parameter init (shapes match the PyTorch module)."""
    ks = jax.random.split(key, 6)
    scale = 0.1
    w1 = scale * jax.random.normal(ks[0], (INPUT_SIZE, HIDDEN_SIZE), jnp.float32)
    b1 = scale * jax.random.normal(ks[1], (1, HIDDEN_SIZE), jnp.float32)
    w2 = scale * jax.random.normal(ks[2], (HIDDEN_SIZE, HIDDEN_SIZE), jnp.float32)
    b2 = scale * jax.random.normal(ks[3], (1, HIDDEN_SIZE), jnp.float32)
    w3 = scale * jax.random.normal(ks[4], (HIDDEN_SIZE, OUTPUT_SIZE), jnp.float32)
    b3 = scale * jax.random.normal(ks[5], (1, OUTPUT_SIZE), jnp.float32)
    return (w1, b1, w2, b2, w3, b3)


def reference_forward_f32(x, params):
    """Pure-JAX f32 reference (matches PyTorch module numerics)."""
    w1, b1, w2, b2, w3, b3 = params
    h1 = jnp.maximum(x @ w1 + b1, 0.0)
    h2 = jnp.maximum(h1 @ w2 + b2, 0.0)
    return h2 @ w3 + b3


def reference_forward_bf16(x, params):
    """Pure-JAX reference mirroring the kernel's bf16-operand / f32-acc path."""
    w1, b1, w2, b2, w3, b3 = params
    bf = jnp.bfloat16
    h1 = jnp.dot(x.astype(bf), w1.astype(bf), preferred_element_type=jnp.float32)
    h1 = jnp.maximum(h1 + b1, 0.0)
    h2 = jnp.dot(h1.astype(bf), w2.astype(bf), preferred_element_type=jnp.float32)
    h2 = jnp.maximum(h2 + b2, 0.0)
    y = jnp.dot(h2.astype(bf), w3.astype(bf), preferred_element_type=jnp.float32)
    return y + b3


if __name__ == "__main__":
    key = jax.random.PRNGKey(0)
    pkey, xkey1, xkey2 = jax.random.split(key, 3)
    params = init_params(pkey)

    # Case 1: replay-buffer-style batch exercising the batch grid
    # (tb=64 -> grid of 4 tiles, with batch padding 200 -> 256).
    x1 = jax.random.normal(xkey1, (200, INPUT_SIZE), jnp.float32)
    out1 = jax.block_until_ready(dqn_forward(x1, params, block_b=64))
    assert out1.shape == (200, OUTPUT_SIZE)
    assert jnp.allclose(out1, reference_forward_bf16(x1, params),
                        atol=1e-4, rtol=1e-3)
    assert jnp.allclose(out1, reference_forward_f32(x1, params),
                        atol=5e-2, rtol=5e-2)

    # Case 2: tiny RL-stepping batch (single tile; dispatch-latency bound).
    x2 = jax.random.normal(xkey2, (8, INPUT_SIZE), jnp.float32)
    out2 = jax.block_until_ready(dqn_forward(x2, params))
    assert out2.shape == (8, OUTPUT_SIZE)
    assert jnp.allclose(out2, reference_forward_bf16(x2, params),
                        atol=1e-4, rtol=1e-3)
    assert jnp.allclose(out2, reference_forward_f32(x2, params),
                        atol=5e-2, rtol=5e-2)

    print("KERNEL_OK")
</pallas_src>

<mosaic_0001>
module attributes {stable_mosaic.version = 11 : i64} {
  func.func @dqn_kernel(%arg0: i32, %arg1: memref<64x4xf32, #tpu.memory_space<vmem>>, %arg2: memref<4x24xbf16, #tpu.memory_space<vmem>>, %arg3: memref<1x24xf32, #tpu.memory_space<vmem>>, %arg4: memref<24x24xbf16, #tpu.memory_space<vmem>>, %arg5: memref<1x24xf32, #tpu.memory_space<vmem>>, %arg6: memref<24x128xbf16, #tpu.memory_space<vmem>>, %arg7: memref<1x128xf32, #tpu.memory_space<vmem>>, %arg8: memref<64x128xf32, #tpu.memory_space<vmem>>) attributes {dimension_semantics = [#tpu.dimension_semantics<parallel>], iteration_bounds = array<i64: 4>, scalar_prefetch = 0 : i64, scratch_operands = 0 : i64, tpu.core_type = #tpu.core_type<tc>, window_params = [{transform_indices = @transform_0, window_bounds = array<i64: 64, 4>}, {pipeline_mode = #tpu.pipeline_mode<synchronous>, transform_indices = @transform_1, window_bounds = array<i64: 4, 24>}, {pipeline_mode = #tpu.pipeline_mode<synchronous>, transform_indices = @transform_2, window_bounds = array<i64: 1, 24>}, {pipeline_mode = #tpu.pipeline_mode<synchronous>, transform_indices = @transform_3, window_bounds = array<i64: 24, 24>}, {pipeline_mode = #tpu.pipeline_mode<synchronous>, transform_indices = @transform_4, window_bounds = array<i64: 1, 24>}, {pipeline_mode = #tpu.pipeline_mode<synchronous>, transform_indices = @transform_5, window_bounds = array<i64: 24, 128>}, {pipeline_mode = #tpu.pipeline_mode<synchronous>, transform_indices = @transform_6, window_bounds = array<i64: 1, 128>}, {transform_indices = @transform_7, window_bounds = array<i64: 64, 128>}]} {
    %c0 = arith.constant 0 : index
    %c0_0 = arith.constant 0 : index
    %0 = vector.load %arg1[%c0, %c0_0] : memref<64x4xf32, #tpu.memory_space<vmem>>, vector<64x4xf32>
    %1 = arith.truncf %0 : vector<64x4xf32> to vector<64x4xbf16>
    %c0_1 = arith.constant 0 : index
    %c0_2 = arith.constant 0 : index
    %2 = vector.load %arg2[%c0_1, %c0_2] : memref<4x24xbf16, #tpu.memory_space<vmem>>, vector<4x24xbf16>
    %cst = arith.constant dense<0.000000e+00> : vector<64x24xf32>
    %3 = tpu.matmul %1, %2, %cst {dimension_numbers = #tpu.dot_dimension_numbers<[1], [0], [0], [1], [0, 0, 1, 1], [], []>} : vector<64x4xbf16>, vector<4x24xbf16>, vector<64x24xf32> -> vector<64x24xf32>
    %c0_3 = arith.constant 0 : index
    %c0_4 = arith.constant 0 : index
    %4 = vector.load %arg3[%c0_3, %c0_4] : memref<1x24xf32, #tpu.memory_space<vmem>>, vector<1x24xf32>
    %5 = vector.broadcast %4 : vector<1x24xf32> to vector<64x24xf32>
    %6 = arith.addf %3, %5 : vector<64x24xf32>
    %cst_5 = arith.constant 0.000000e+00 : f32
    %7 = vector.broadcast %cst_5 : f32 to vector<64x24xf32>
    %8 = arith.maximumf %6, %7 : vector<64x24xf32>
    %9 = arith.truncf %8 : vector<64x24xf32> to vector<64x24xbf16>
    %c0_6 = arith.constant 0 : index
    %c0_7 = arith.constant 0 : index
    %10 = vector.load %arg4[%c0_6, %c0_7] : memref<24x24xbf16, #tpu.memory_space<vmem>>, vector<24x24xbf16>
    %cst_8 = arith.constant dense<0.000000e+00> : vector<64x24xf32>
    %11 = tpu.matmul %9, %10, %cst_8 {dimension_numbers = #tpu.dot_dimension_numbers<[1], [0], [0], [1], [0, 0, 1, 1], [], []>} : vector<64x24xbf16>, vector<24x24xbf16>, vector<64x24xf32> -> vector<64x24xf32>
    %c0_9 = arith.constant 0 : index
    %c0_10 = arith.constant 0 : index
    %12 = vector.load %arg5[%c0_9, %c0_10] : memref<1x24xf32, #tpu.memory_space<vmem>>, vector<1x24xf32>
    %13 = vector.broadcast %12 : vector<1x24xf32> to vector<64x24xf32>
    %14 = arith.addf %11, %13 : vector<64x24xf32>
    %cst_11 = arith.constant 0.000000e+00 : f32
    %15 = vector.broadcast %cst_11 : f32 to vector<64x24xf32>
    %16 = arith.maximumf %14, %15 : vector<64x24xf32>
    %17 = arith.truncf %16 : vector<64x24xf32> to vector<64x24xbf16>
    %c0_12 = arith.constant 0 : index
    %c0_13 = arith.constant 0 : index
    %18 = vector.load %arg6[%c0_12, %c0_13] : memref<24x128xbf16, #tpu.memory_space<vmem>>, vector<24x128xbf16>
    %cst_14 = arith.constant dense<0.000000e+00> : vector<64x128xf32>
    %19 = tpu.matmul %17, %18, %cst_14 {dimension_numbers = #tpu.dot_dimension_numbers<[1], [0], [0], [1], [0, 0, 1, 1], [], []>} : vector<64x24xbf16>, vector<24x128xbf16>, vector<64x128xf32> -> vector<64x128xf32>
    %c0_15 = arith.constant 0 : index
    %c0_16 = arith.constant 0 : index
    %20 = vector.load %arg7[%c0_15, %c0_16] : memref<1x128xf32, #tpu.memory_space<vmem>>, vector<1x128xf32>
    %21 = vector.broadcast %20 : vector<1x128xf32> to vector<64x128xf32>
    %22 = arith.addf %19, %21 : vector<64x128xf32>
    %c0_17 = arith.constant 0 : index
    %c0_18 = arith.constant 0 : index
    %23 = vector.load %arg8[%c0_17, %c0_18] : memref<64x128xf32, #tpu.memory_space<vmem>>, vector<64x128xf32>
    tpu.vector_store %arg8[%c0_17, %c0_18], %22 {strides = array<i32>} : memref<64x128xf32, #tpu.memory_space<vmem>>, vector<64x128xf32>,
    return
  }
  func.func @transform_0(%arg0: i32) -> (i32, i32) {
    %c0_i32 = arith.constant 0 : i32
    %c0_i32_0 = arith.constant 0 : i32
    return %arg0, %c0_i32 : i32, i32
  }
  func.func @transform_1(%arg0: i32) -> (i32, i32) {
    %c0_i32 = arith.constant 0 : i32
    %c0_i32_0 = arith.constant 0 : i32
    %c0_i32_1 = arith.constant 0 : i32
    return %c0_i32, %c0_i32_0 : i32, i32
  }
  func.func @transform_2(%arg0: i32) -> (i32, i32) {
    %c0_i32 = arith.constant 0 : i32
    %c0_i32_0 = arith.constant 0 : i32
    %c0_i32_1 = arith.constant 0 : i32
    return %c0_i32, %c0_i32_0 : i32, i32
  }
  func.func @transform_3(%arg0: i32) -> (i32, i32) {
    %c0_i32 = arith.constant 0 : i32
    %c0_i32_0 = arith.constant 0 : i32
    %c0_i32_1 = arith.constant 0 : i32
    return %c0_i32, %c0_i32_0 : i32, i32
  }
  func.func @transform_4(%arg0: i32) -> (i32, i32) {
    %c0_i32 = arith.constant 0 : i32
    %c0_i32_0 = arith.constant 0 : i32
    %c0_i32_1 = arith.constant 0 : i32
    return %c0_i32, %c0_i32_0 : i32, i32
  }
  func.func @transform_5(%arg0: i32) -> (i32, i32) {
    %c0_i32 = arith.constant 0 : i32
    %c0_i32_0 = arith.constant 0 : i32
    %c0_i32_1 = arith.constant 0 : i32
    return %c0_i32, %c0_i32_0 : i32, i32
  }
  func.func @transform_6(%arg0: i32) -> (i32, i32) {
    %c0_i32 = arith.constant 0 : i32
    %c0_i32_0 = arith.constant 0 : i32
    %c0_i32_1 = arith.constant 0 : i32
    return %c0_i32, %c0_i32_0 : i32, i32
  }
  func.func @transform_7(%arg0: i32) -> (i32, i32) {
    %c0_i32 = arith.constant 0 : i32
    %c0_i32_0 = arith.constant 0 : i32
    return %arg0, %c0_i32 : i32, i32
  }
}

</mosaic_0001>

<llo_original>
// kernel: tpu_custom_call.1
$region0: #{tpu_custom_call.1}
  #allocation0 [shape = 'u32[]', space=smem, size = 0x4, offset = 0x4, fixed_abs, tag = 'smem constant byte address 0x4 - core index']
  #allocation1 [shape = 'u32[144,128]{1,0:T(1,128)}', space=vmem, size = 0x12000, scoped, tag = 'internal scratch']
  %s0 = inlined_call_operand.vmem [shape: f32[256,4], index: 0, kind: input, shape index: {}]
  %s1 = inlined_call_operand.vmem [shape: bf16[4,24], index: 1, kind: input, shape index: {}]
  %s2 = inlined_call_operand.vmem [shape: f32[1,24], index: 2, kind: input, shape index: {}]
  %s3 = inlined_call_operand.vmem [shape: bf16[24,24], index: 3, kind: input, shape index: {}]
  %s4 = inlined_call_operand.vmem [shape: f32[1,24], index: 4, kind: input, shape index: {}]
  %s5 = inlined_call_operand.vmem [shape: bf16[24,128], index: 5, kind: input, shape index: {}]
  %s6 = inlined_call_operand.vmem [shape: f32[1,128], index: 6, kind: input, shape index: {}]
  %s7 = inlined_call_operand.hbm [shape: f32[256,128], index: 7, kind: output, shape index: {}]
  %s8 = sld [smem:[#allocation0]]
  $region61: #{tpu_custom_call.1} parent=0
    _
  %s10 = ssub.s32 1, %s8
  %s11 = scalar_select 0, %s10, %s8
  $region1: #{tpu_custom_call.1} parent=0
    #allocation2 [shape = 'u8[65536]{0}', space=vmem, size = 0x10000, scoped, tag = 'output window, operand 0']
    #allocation3 [shape = 's32[2]{0}', space=sflag, size = 0x8, scoped, tag = 'scoped memory for tpu_custom_call.1']
    %12 = vsyncpa [#allocation3], 0
    %s13 = scalar_lea.sflag [#allocation3], 1
    %14 = vsyncpa %s13, 0
    loop: start=0, step=1, limit=6
    $region2: #{tpu_custom_call.1} parent=1 // loop_pre_header
      _
    $region3: #{tpu_custom_call.1} parent=1 // loop_header
      %s16 = sphi 0, %s20
      %p17 = scmp.ge.s32.totalorder %s16, 6
      %s26 = sphi 0, %s28
      %s29 = sphi 0, %s26
      %s30 = sphi 0, %s29
      %s46 = sphi 0, %s30
      %s50 = sphi 0, %s50
      %s52 = sphi 0, %s50
      %s53 = sphi 0, %s52
      %s67 = sphi 0, %s53
      %s71 = sphi 0, %s71
      %s73 = sphi 0, %s71
      %s74 = sphi 0, %s73
      %s88 = sphi 0, %s74
      %s92 = sphi 0, %s92
      %s94 = sphi 0, %s92
      %s95 = sphi 0, %s94
      %s109 = sphi 0, %s95
      %s113 = sphi 0, %s113
      %s115 = sphi 0, %s113
      %s116 = sphi 0, %s115
      %s130 = sphi 0, %s116
      %s134 = sphi 0, %s134
      %s136 = sphi 0, %s134
      %s137 = sphi 0, %s136
      %s151 = sphi 0, %s137
      %s155 = sphi 0, %s155
      %s157 = sphi 0, %s155
      %s158 = sphi 0, %s157
      %s172 = sphi 0, %s158
      %s178 = sphi 0, %s180
      %s181 = sphi 0, %s178
      %s182 = sphi 0, %s181
      %s198 = sphi 0, %s182
    $region4: #{tpu_custom_call.1} parent=1 // loop_header_branch
      %19 = sbr.rel (%p17) target = $region8
    $region5: #{tpu_custom_call.1} parent=1 // loop_body
      %s21 = ssub.s32 %s16, 1
      %s22 = ssub.s32 %s16, 2
      %s23 = sadd.s32 %s16, 1
      %s24 = ssub.s32 %s16, %s23
      %p25 = scmp.eq.s32.totalorder %s24, 0
      %s27 = sadd.s32 %s26, 1
      %s28 = scalar_select %p25, %s26, %s27
      %p31 = pneg %p25
      %p32 = scmp.eq.s32.totalorder %s16, 3
      %p33 = por %p31, %p32
      %p34 = scmp.ne.s32.totalorder %s26, %s29
      %p35 = scmp.eq.s32.totalorder %s16, 0
      %p36 = por %p34, %p35
      %p37 = scmp.ne.s32.totalorder %s26, %s29
      %p38 = scmp.eq.s32.totalorder %s21, 3
      %p39 = por %p37, %p38
      %p40 = scmp.ne.s32.totalorder %s29, %s30
      %p41 = scmp.eq.s32.totalorder %s21, 0
      %p42 = por %p40, %p41
      %p43 = scmp.ne.s32.totalorder %s29, %s30
      %p44 = scmp.eq.s32.totalorder %s22, 3
      %p45 = por %p43, %p44
      %p47 = scmp.ne.s32.totalorder %s30, %s46
      %p48 = scmp.eq.s32.totalorder %s22, 0
      %p49 = por %p47, %p48
      %s51 = sadd.s32 %s50, 1
      %p54 = scmp.eq.s32.totalorder %s16, 3
      %p55 = scmp.ne.s32.totalorder %s50, %s52
      %p56 = scmp.eq.s32.totalorder %s16, 0
      %p57 = por %p55, %p56
      %p58 = scmp.ne.s32.totalorder %s50, %s52
      %p59 = scmp.eq.s32.totalorder %s21, 3
      %p60 = por %p58, %p59
      %p61 = scmp.ne.s32.totalorder %s52, %s53
      %p62 = scmp.eq.s32.totalorder %s21, 0
      %p63 = por %p61, %p62
      %p64 = scmp.ne.s32.totalorder %s52, %s53
      %p65 = scmp.eq.s32.totalorder %s22, 3
      %p66 = por %p64, %p65
      %p68 = scmp.ne.s32.totalorder %s53, %s67
      %p69 = scmp.eq.s32.totalorder %s22, 0
      %p70 = por %p68, %p69
      %s72 = sadd.s32 %s71, 1
      %p75 = scmp.eq.s32.totalorder %s16, 3
      %p76 = scmp.ne.s32.totalorder %s71, %s73
      %p77 = scmp.eq.s32.totalorder %s16, 0
      %p78 = por %p76, %p77
      %p79 = scmp.ne.s32.totalorder %s71, %s73
      %p80 = scmp.eq.s32.totalorder %s21, 3
      %p81 = por %p79, %p80
      %p82 = scmp.ne.s32.totalorder %s73, %s74
      %p83 = scmp.eq.s32.totalorder %s21, 0
      %p84 = por %p82, %p83
      %p85 = scmp.ne.s32.totalorder %s73, %s74
      %p86 = scmp.eq.s32.totalorder %s22, 3
      %p87 = por %p85, %p86
      %p89 = scmp.ne.s32.totalorder %s74, %s88
      %p90 = scmp.eq.s32.totalorder %s22, 0
      %p91 = por %p89, %p90
      %s93 = sadd.s32 %s92, 1
      %p96 = scmp.eq.s32.totalorder %s16, 3
      %p97 = scmp.ne.s32.totalorder %s92, %s94
      %p98 = scmp.eq.s32.totalorder %s16, 0
      %p99 = por %p97, %p98
      %p100 = scmp.ne.s32.totalorder %s92, %s94
      %p101 = scmp.eq.s32.totalorder %s21, 3
      %p102 = por %p100, %p101
      %p103 = scmp.ne.s32.totalorder %s94, %s95
      %p104 = scmp.eq.s32.totalorder %s21, 0
      %p105 = por %p103, %p104
      %p106 = scmp.ne.s32.totalorder %s94, %s95
      %p107 = scmp.eq.s32.totalorder %s22, 3
      %p108 = por %p106, %p107
      %p110 = scmp.ne.s32.totalorder %s95, %s109
      %p111 = scmp.eq.s32.totalorder %s22, 0
      %p112 = por %p110, %p111
      %s114 = sadd.s32 %s113, 1
      %p117 = scmp.eq.s32.totalorder %s16, 3
      %p118 = scmp.ne.s32.totalorder %s113, %s115
      %p119 = scmp.eq.s32.totalorder %s16, 0
      %p120 = por %p118, %p119
      %p121 = scmp.ne.s32.totalorder %s113, %s115
      %p122 = scmp.eq.s32.totalorder %s21, 3
      %p123 = por %p121, %p122
      %p124 = scmp.ne.s32.totalorder %s115, %s116
      %p125 = scmp.eq.s32.totalorder %s21, 0
      %p126 = por %p124, %p125
      %p127 = scmp.ne.s32.totalorder %s115, %s116
      %p128 = scmp.eq.s32.totalorder %s22, 3
      %p129 = por %p127, %p128
      %p131 = scmp.ne.s32.totalorder %s116, %s130
      %p132 = scmp.eq.s32.totalorder %s22, 0
      %p133 = por %p131, %p132
      %s135 = sadd.s32 %s134, 1
      %p138 = scmp.eq.s32.totalorder %s16, 3
      %p139 = scmp.ne.s32.totalorder %s134, %s136
      %p140 = scmp.eq.s32.totalorder %s16, 0
      %p141 = por %p139, %p140
      %p142 = scmp.ne.s32.totalorder %s134, %s136
      %p143 = scmp.eq.s32.totalorder %s21, 3
      %p144 = por %p142, %p143
      %p145 = scmp.ne.s32.totalorder %s136, %s137
      %p146 = scmp.eq.s32.totalorder %s21, 0
      %p147 = por %p145, %p146
      %p148 = scmp.ne.s32.totalorder %s136, %s137
      %p149 = scmp.eq.s32.totalorder %s22, 3
      %p150 = por %p148, %p149
      %p152 = scmp.ne.s32.totalorder %s137, %s151
      %p153 = scmp.eq.s32.totalorder %s22, 0
      %p154 = por %p152, %p153
      %s156 = sadd.s32 %s155, 1
      %p159 = scmp.eq.s32.totalorder %s16, 3
      %p160 = scmp.ne.s32.totalorder %s155, %s157
      %p161 = scmp.eq.s32.totalorder %s16, 0
      %p162 = por %p160, %p161
      %p163 = scmp.ne.s32.totalorder %s155, %s157
      %p164 = scmp.eq.s32.totalorder %s21, 3
      %p165 = por %p163, %p164
      %p166 = scmp.ne.s32.totalorder %s157, %s158
      %p167 = scmp.eq.s32.totalorder %s21, 0
      %p168 = por %p166, %p167
      %p169 = scmp.ne.s32.totalorder %s157, %s158
      %p170 = scmp.eq.s32.totalorder %s22, 3
      %p171 = por %p169, %p170
      %p173 = scmp.ne.s32.totalorder %s158, %s172
      %p174 = scmp.eq.s32.totalorder %s22, 0
      %p175 = por %p173, %p174
      %s176 = ssub.s32 %s16, %s23
      %p177 = scmp.eq.s32.totalorder %s176, 0
      %s179 = sadd.s32 %s178, 1
      %s180 = scalar_select %p177, %s178, %s179
      %p183 = pneg %p177
      %p184 = scmp.eq.s32.totalorder %s16, 3
      %p185 = por %p183, %p184
      %p186 = scmp.ne.s32.totalorder %s178, %s181
      %p187 = scmp.eq.s32.totalorder %s16, 0
      %p188 = por %p186, %p187
      %p189 = scmp.ne.s32.totalorder %s178, %s181
      %p190 = scmp.eq.s32.totalorder %s21, 3
      %p191 = por %p189, %p190
      %p192 = scmp.ne.s32.totalorder %s181, %s182
      %p193 = scmp.eq.s32.totalorder %s21, 0
      %p194 = por %p192, %p193
      %p195 = scmp.ne.s32.totalorder %s181, %s182
      %p196 = scmp.eq.s32.totalorder %s22, 3
      %p197 = por %p195, %p196
      %p199 = scmp.ne.s32.totalorder %s182, %s198
      %p200 = scmp.eq.s32.totalorder %s22, 0
      %p201 = por %p199, %p200
      %p202 = scmp.le.s32.totalorder 1, %s16
      %p203 = scmp.lt.s32.totalorder %s16, 5
      %p204 = pnand %p202, %p203
      %p205 = pneg %p204
      // Predicated region
      $region9: #{tpu_custom_call.1} parent=5 // pred_check
        _
      $region10: #{tpu_custom_call.1} parent=5 // pred_check_branch
        %207 = sbr.rel (%p204) target = $region12
      $region11: #{tpu_custom_call.1} parent=5 // pred_region
        %s208 = ssub.s32 %s16, 1
        // Predicated region
        $region13: #{tpu_custom_call.1} parent=11 // pred_check
          %p209 = pneg %p63
        $region14: #{tpu_custom_call.1} parent=11 // pred_check_branch
          %211 = sbr.rel (%p209) target = $region16
        $region15: #{tpu_custom_call.1} parent=11 // pred_region
          _
        $region16: #{tpu_custom_call.1} parent=11 // pred_fallthru
          _
        // Predicated region
        $region17: #{tpu_custom_call.1} parent=11 // pred_check
          %p212 = pneg %p84
        $region18: #{tpu_custom_call.1} parent=11 // pred_check_branch
          %214 = sbr.rel (%p212) target = $region20
        $region19: #{tpu_custom_call.1} parent=11 // pred_region
          _
        $region20: #{tpu_custom_call.1} parent=11 // pred_fallthru
          _
        // Predicated region
        $region21: #{tpu_custom_call.1} parent=11 // pred_check
          %p215 = pneg %p105
        $region22: #{tpu_custom_call.1} parent=11 // pred_check_branch
          %217 = sbr.rel (%p215) target = $region24
        $region23: #{tpu_custom_call.1} parent=11 // pred_region
          _
        $region24: #{tpu_custom_call.1} parent=11 // pred_fallthru
          _
        // Predicated region
        $region25: #{tpu_custom_call.1} parent=11 // pred_check
          %p218 = pneg %p126
        $region26: #{tpu_custom_call.1} parent=11 // pred_check_branch
          %220 = sbr.rel (%p218) target = $region28
        $region27: #{tpu_custom_call.1} parent=11 // pred_region
          _
        $region28: #{tpu_custom_call.1} parent=11 // pred_fallthru
          _
        // Predicated region
        $region29: #{tpu_custom_call.1} parent=11 // pred_check
          %p221 = pneg %p147
        $region30: #{tpu_custom_call.1} parent=11 // pred_check_branch
          %223 = sbr.rel (%p221) target = $region32
        $region31: #{tpu_custom_call.1} parent=11 // pred_region
          _
        $region32: #{tpu_custom_call.1} parent=11 // pred_fallthru
          _
        // Predicated region
        $region33: #{tpu_custom_call.1} parent=11 // pred_check
          %p224 = pneg %p168
        $region34: #{tpu_custom_call.1} parent=11 // pred_check_branch
          %226 = sbr.rel (%p224) target = $region36
        $region35: #{tpu_custom_call.1} parent=11 // pred_region
          _
        $region36: #{tpu_custom_call.1} parent=11 // pred_fallthru
          _
      $region12: #{tpu_custom_call.1} parent=5 // pred_fallthru
        _
      %p227 = scmp.lt.s32.totalorder %s16, 4
      // Predicated region
      $region37: #{tpu_custom_call.1} parent=5 // pred_check
        %p228 = pneg %p227
      $region38: #{tpu_custom_call.1} parent=5 // pred_check_branch
        %230 = sbr.rel (%p228) target = $region40
      $region39: #{tpu_custom_call.1} parent=5 // pred_region
        // Predicated region
        $region41: #{tpu_custom_call.1} parent=39 // pred_check
          %p231 = pneg %p36
        $region42: #{tpu_custom_call.1} parent=39 // pred_check_branch
          %233 = sbr.rel (%p231) target = $region44
        $region43: #{tpu_custom_call.1} parent=39 // pred_region
          %s234 = smul.u32 8, %s16
          %p235 = scmp.lt.s32.totalorder %s234, 31
          %s236 = scalar_select %p235, %s234, 31
          %s237 = smul.addr %s236, 8
          %s238 = scalar_lea.vmem %s0, %s237
          %s239 = smul.u32 8, %s16
        $region44: #{tpu_custom_call.1} parent=39 // pred_fallthru
          _
      $region40: #{tpu_custom_call.1} parent=5 // pred_fallthru
        _
      %p240 = scmp.le.s32.totalorder 1, %s16
      %p241 = scmp.lt.s32.totalorder %s16, 5
      %p242 = pnand %p240, %p241
      %p243 = pneg %p242
      // Predicated region
      $region45: #{tpu_custom_call.1} parent=5 // pred_check
        _
      $region46: #{tpu_custom_call.1} parent=5 // pred_check_branch
        %245 = sbr.rel (%p242) target = $region48
      $region47: #{tpu_custom_call.1} parent=5 // pred_region
        %s246 = ssub.s32 %s16, 1
        %s247 = smul.u32 8, %s21
        %p248 = scmp.lt.s32.totalorder %s247, 31
        %s249 = scalar_select %p248, %s247, 31
        %s250 = smul.addr %s249, 8
        %s251 = scalar_lea.vmem %s0, %s250
        %p252 = pneg %p42
        %p253 = pneg %p39
        %p254 = pneg %p63
        %p255 = pneg %p60
        %p256 = pneg %p84
        %p257 = pneg %p81
        %p258 = pneg %p105
        %p259 = pneg %p102
        %p260 = pneg %p126
        %p261 = pneg %p123
        %p262 = pneg %p147
        %p263 = pneg %p144
        %p264 = pneg %p168
        %p265 = pneg %p165
        %p266 = pneg %p194
        %p267 = pneg %p191
        %s268 = sand.u32 %s181, 1
        %s269 = scalar_lea.sflag [#allocation3], %s268
        %s270 = sand.u32 %s181, 1
        %s271 = smul.addr %s270, 64
        %s272 = scalar_lea.vmem [#allocation2], %s271
        %s273 = smul.u32 8, %s21
        %p274 = scmp.lt.s32.totalorder %s273, 31
        %s275 = scalar_select %p274, %s273, 31
        %s276 = smul.addr %s275, 8
        %s277 = scalar_lea.vmem %s0, %s276
        %s278 = smul.u32 8, %s21
        %s279 = smul.u32 8, %s21
        %v281 = vld [vmem:[%s277] sm:$0xff]
        %v282 = vld [vmem:[%s277 + $0x8] sm:$0xff]
        %v283 = vld [vmem:[%s277 + $0x10] sm:$0xff]
        %v284 = vld [vmem:[%s277 + $0x18] sm:$0xff]
        %v285 = vld [vmem:[%s277 + $0x20] sm:$0xff]
        %v286 = vld [vmem:[%s277 + $0x28] sm:$0xff]
        %v287 = vld [vmem:[%s277 + $0x30] sm:$0xff]
        %v288 = vld [vmem:[%s277 + $0x38] sm:$0xff]
        %v289 = vpack.c.bf16 %v282, %v281
        %v290 = vpack.c.bf16 %v284, %v283
        %v291 = vpack.c.bf16 %v286, %v285
        %v292 = vpack.c.bf16 %v288, %v287
        %v293 = vld [vmem:[%s1] sm:$0x3]
        %v294 = vld [vmem:[%s2] sm:$0x1]
        %v296 = vlaneseq
        %v297 = vshrl.u32 %v296, 7
        %v298 = vsub.s32 0, %v297
        %v299 = vrot.slane %v294, %v298
        %vm301 = vcmask 31744
        %v303 = vsel %vm301, %v289, 0
        %v306 = vsel %vm301, %v290, 0
        %v309 = vsel %vm301, %v291, 0
        %v312 = vsel %vm301, %v292, 0
        %vm314 = vcmask 1041408
        %v316 = vsel %vm314, %v293, 0
        %318 = vmatprep.subr.bf16.mxu0 0
        %319 = vmatpush1.bf16.msra.mxu0 %v316
        %320 = vmatprep.subr.bf16.mxu0 0
        %321 = vmatpush1.bf16.msra.mxu0 0
        %322 = vmatprep.subr.bf16.mxu0 0
        %323 = vmatpush1.bf16.msra.mxu0 0
        %324 = vmatprep.subr.bf16.mxu0 0
        %325 = vmatpush1.bf16.msra.mxu0 0
        %326 = vmatprep.subr.bf16.mxu0 0
        %327 = vmatpush1.bf16.msra.mxu0 0
        %328 = vmatprep.subr.bf16.mxu0 0
        %329 = vmatpush1.bf16.msra.mxu0 0
        %330 = vmatprep.subr.bf16.mxu0 0
        %331 = vmatpush1.bf16.msra.mxu0 0
        %332 = vmatprep.subr.bf16.mxu0 0
        %333 = vmatpush1.bf16.msra.mxu0 0
        %334 = vmatprep.subr.bf16.mxu0 0
        %335 = vmatpush1.bf16.msra.mxu0 0
        %336 = vmatprep.subr.bf16.mxu0 0
        %337 = vmatpush1.bf16.msra.mxu0 0
        %338 = vmatprep.subr.bf16.mxu0 0
        %339 = vmatpush1.bf16.msra.mxu0 0
        %340 = vmatprep.subr.bf16.mxu0 0
        %341 = vmatpush1.bf16.msra.mxu0 0
        %342 = vmatprep.subr.bf16.mxu0 0
        %343 = vmatpush1.bf16.msra.mxu0 0
        %344 = vmatprep.subr.bf16.mxu0 0
        %345 = vmatpush1.bf16.msra.mxu0 0
        %346 = vmatprep.subr.bf16.mxu0 0
        %347 = vmatpush1.bf16.msra.mxu0 0
        %348 = vmatprep.subr.bf16.mxu0 0
        %349 = vmatpush1.bf16.msra.mxu0 0
        %350 = vmatprep.mubr.bf16.mxu0 0
        %351 = vmatmul.mubr.bf16.gmra.mrb[0].mxu0 %v303
        %v352 = vpop.f32.mrb[0].mxu0
        %v353 = vadd.f32 %v299, %v352
        %v354 = vpop.f32.mrb[0].mxu0
        %v355 = vpop.f32.mrb[0].mxu0
        %v356 = vadd.f32 %v299, %v355
        %v357 = vpop.f32.mrb[0].mxu0
        %358 = vmatprep.mubr.bf16.mxu0 0
        %359 = vmatmul.mubr.bf16.gmra.mrb[0].mxu0 %v306
        %v360 = vpop.f32.mrb[0].mxu0
        %v361 = vadd.f32 %v299, %v360
        %v362 = vpop.f32.mrb[0].mxu0
        %v363 = vpop.f32.mrb[0].mxu0
        %v364 = vadd.f32 %v299, %v363
        %v365 = vpop.f32.mrb[0].mxu0
        %366 = vmatprep.mubr.bf16.mxu0 0
        %367 = vmatmul.mubr.bf16.gmra.mrb[0].mxu0 %v309
        %v368 = vpop.f32.mrb[0].mxu0
        %v369 = vadd.f32 %v299, %v368
        %v370 = vpop.f32.mrb[0].mxu0
        %v371 = vpop.f32.mrb[0].mxu0
        %v372 = vadd.f32 %v299, %v371
        %v373 = vpop.f32.mrb[0].mxu0
        %374 = vmatprep.mubr.bf16.mxu0 0
        %375 = vmatmul.mubr.bf16.gmra.mrb[0].mxu0 %v312
        %v376 = vpop.f32.mrb[0].mxu0
        %v377 = vadd.f32 %v299, %v376
        %v378 = vpop.f32.mrb[0].mxu0
        %v379 = vpop.f32.mrb[0].mxu0
        %v380 = vadd.f32 %v299, %v379
        %v381 = vpop.f32.mrb[0].mxu0
        %382 = vdwg.mxu0
        %v383 = vmax.f32 %v353, 0.0
        %v384 = vmax.f32 %v356, 0.0
        %v385 = vmax.f32 %v361, 0.0
        %v386 = vmax.f32 %v364, 0.0
        %v387 = vmax.f32 %v369, 0.0
        %v388 = vmax.f32 %v372, 0.0
        %v389 = vmax.f32 %v377, 0.0
        %v390 = vmax.f32 %v380, 0.0
        %v391 = vpack.c.bf16 %v384, %v383
        %v392 = vpack.c.bf16 %v386, %v385
        %v393 = vpack.c.bf16 %v388, %v387
        %v394 = vpack.c.bf16 %v390, %v389
        %v395 = vld [vmem:[%s3] sm:$0xf]
        %v396 = vld [vmem:[%s3 + $0x4] sm:$0xf]
        %v397 = vld [vmem:[%s3 + $0x8] sm:$0xf]
        %v398 = vld [vmem:[%s4] sm:$0x1]
        %v400 = vlaneseq
        %v401 = vshrl.u32 %v400, 7
        %v402 = vsub.s32 0, %v401
        %v403 = vrot.slane %v398, %v402
        %v408 = vunpack.c.l.b16 %v395
        %v409 = vunpack.c.l.b16 %v396
        %v410 = vunpack.c.l.b16 %v397
        %v411 = vpack.c.b16 %v409, %v408
        %v412 = vpack.c.b16 %v410, %v410
        %vm414 = vcmask 195584
        %v416 = vsel %vm414, %v391, 0
        %v419 = vsel %vm414, %v392, 0
        %v422 = vsel %vm414, %v393, 0
        %v425 = vsel %vm414, %v394, 0
        %vm427 = vcmask 1043456
        %v429 = vsel %vm427, %v412, 0
        %431 = vmatprep.subr.bf16.mxu0 0
        %432 = vmatpush1.bf16.msra.mxu0 %v411
        %433 = vmatprep.subr.bf16.mxu0 0
        %434 = vmatpush1.bf16.msra.mxu0 %v429
        %435 = vmatprep.subr.bf16.mxu0 0
        %436 = vmatpush1.bf16.msra.mxu0 0
        %437 = vmatprep.subr.bf16.mxu0 0
        %438 = vmatpush1.bf16.msra.mxu0 0
        %439 = vmatprep.subr.bf16.mxu0 0
        %440 = vmatpush1.bf16.msra.mxu0 0
        %441 = vmatprep.subr.bf16.mxu0 0
        %442 = vmatpush1.bf16.msra.mxu0 0
        %443 = vmatprep.subr.bf16.mxu0 0
        %444 = vmatpush1.bf16.msra.mxu0 0
        %445 = vmatprep.subr.bf16.mxu0 0
        %446 = vmatpush1.bf16.msra.mxu0 0
        %447 = vmatprep.subr.bf16.mxu0 0
        %448 = vmatpush1.bf16.msra.mxu0 0
        %449 = vmatprep.subr.bf16.mxu0 0
        %450 = vmatpush1.bf16.msra.mxu0 0
        %451 = vmatprep.subr.bf16.mxu0 0
        %452 = vmatpush1.bf16.msra.mxu0 0
        %453 = vmatprep.subr.bf16.mxu0 0
        %454 = vmatpush1.bf16.msra.mxu0 0
        %455 = vmatprep.subr.bf16.mxu0 0
        %456 = vmatpush1.bf16.msra.mxu0 0
        %457 = vmatprep.subr.bf16.mxu0 0
        %458 = vmatpush1.bf16.msra.mxu0 0
        %459 = vmatprep.subr.bf16.mxu0 0
        %460 = vmatpush1.bf16.msra.mxu0 0
        %461 = vmatprep.subr.bf16.mxu0 0
        %462 = vmatpush1.bf16.msra.mxu0 0
        %463 = vmatprep.mubr.bf16.mxu0 0
        %464 = vmatmul.mubr.bf16.gmra.mrb[0].mxu0 %v416
        %v465 = vpop.f32.mrb[0].mxu0
        %v466 = vadd.f32 %v403, %v465
        %v467 = vpop.f32.mrb[0].mxu0
        %v468 = vpop.f32.mrb[0].mxu0
        %v469 = vadd.f32 %v403, %v468
        %v470 = vpop.f32.mrb[0].mxu0
        %471 = vmatprep.mubr.bf16.mxu0 0
        %472 = vmatmul.mubr.bf16.gmra.mrb[0].mxu0 %v419
        %v473 = vpop.f32.mrb[0].mxu0
        %v474 = vadd.f32 %v403, %v473
        %v475 = vpop.f32.mrb[0].mxu0
        %v476 = vpop.f32.mrb[0].mxu0
        %v477 = vadd.f32 %v403, %v476
        %v478 = vpop.f32.mrb[0].mxu0
        %479 = vmatprep.mubr.bf16.mxu0 0
        %480 = vmatmul.mubr.bf16.gmra.mrb[0].mxu0 %v422
        %v481 = vpop.f32.mrb[0].mxu0
        %v482 = vadd.f32 %v403, %v481
        %v483 = vpop.f32.mrb[0].mxu0
        %v484 = vpop.f32.mrb[0].mxu0
        %v485 = vadd.f32 %v403, %v484
        %v486 = vpop.f32.mrb[0].mxu0
        %487 = vmatprep.mubr.bf16.mxu0 0
        %488 = vmatmul.mubr.bf16.gmra.mrb[0].mxu0 %v425
        %v489 = vpop.f32.mrb[0].mxu0
        %v490 = vadd.f32 %v403, %v489
        %v491 = vpop.f32.mrb[0].mxu0
        %v492 = vpop.f32.mrb[0].mxu0
        %v493 = vadd.f32 %v403, %v492
        %v494 = vpop.f32.mrb[0].mxu0
        %495 = vdwg.mxu0
        %v496 = vmax.f32 %v466, 0.0
        %v497 = vmax.f32 %v469, 0.0
        %v498 = vmax.f32 %v474, 0.0
        %v499 = vmax.f32 %v477, 0.0
        %v500 = vmax.f32 %v482, 0.0
        %v501 = vmax.f32 %v485, 0.0
        %v502 = vmax.f32 %v490, 0.0
        %v503 = vmax.f32 %v493, 0.0
        %v504 = vpack.c.bf16 %v497, %v496
        %v505 = vpack.c.bf16 %v499, %v498
        %v506 = vpack.c.bf16 %v501, %v500
        %v507 = vpack.c.bf16 %v503, %v502
        %v508 = vld [vmem:[%s5] sm:$0xf]
        %v509 = vld [vmem:[%s5 + $0x4] sm:$0xf]
        %v510 = vld [vmem:[%s5 + $0x8] sm:$0xf]
        %v511 = vld [vmem:[%s6] sm:$0x1]
        %v513 = vlaneseq
        %v514 = vshrl.u32 %v513, 7
        %v515 = vsub.s32 0, %v514
        %v516 = vrot.slane %v511, %v515
        %v521 = vunpack.c.l.b16 %v508
        %v522 = vunpack.c.l.b16 %v509
        %v523 = vunpack.c.l.b16 %v510
        %v524 = vpack.c.b16 %v522, %v521
        %v525 = vpack.c.b16 %v523, %v523
        %v528 = vsel %vm414, %v504, 0
        %v531 = vsel %vm414, %v505, 0
        %v534 = vsel %vm414, %v506, 0
        %v537 = vsel %vm414, %v507, 0
        %v540 = vsel %vm427, %v525, 0
        %542 = vmatprep.subr.bf16.mxu0 0
        %543 = vmatpush1.bf16.msra.mxu0 %v524
        %544 = vmatprep.subr.bf16.mxu0 0
        %545 = vmatpush1.bf16.msra.mxu0 %v540
        %546 = vmatprep.subr.bf16.mxu0 0
        %547 = vmatpush1.bf16.msra.mxu0 0
        %548 = vmatprep.subr.bf16.mxu0 0
        %549 = vmatpush1.bf16.msra.mxu0 0
        %550 = vmatprep.subr.bf16.mxu0 0
        %551 = vmatpush1.bf16.msra.mxu0 0
        %552 = vmatprep.subr.bf16.mxu0 0
        %553 = vmatpush1.bf16.msra.mxu0 0
        %554 = vmatprep.subr.bf16.mxu0 0
        %555 = vmatpush1.bf16.msra.mxu0 0
        %556 = vmatprep.subr.bf16.mxu0 0
        %557 = vmatpush1.bf16.msra.mxu0 0
        %558 = vmatprep.subr.bf16.mxu0 0
        %559 = vmatpush1.bf16.msra.mxu0 0
        %560 = vmatprep.subr.bf16.mxu0 0
        %561 = vmatpush1.bf16.msra.mxu0 0
        %562 = vmatprep.subr.bf16.mxu0 0
        %563 = vmatpush1.bf16.msra.mxu0 0
        %564 = vmatprep.subr.bf16.mxu0 0
        %565 = vmatpush1.bf16.msra.mxu0 0
        %566 = vmatprep.subr.bf16.mxu0 0
        %567 = vmatpush1.bf16.msra.mxu0 0
        %568 = vmatprep.subr.bf16.mxu0 0
        %569 = vmatpush1.bf16.msra.mxu0 0
        %570 = vmatprep.subr.bf16.mxu0 0
        %571 = vmatpush1.bf16.msra.mxu0 0
        %572 = vmatprep.subr.bf16.mxu0 0
        %573 = vmatpush1.bf16.msra.mxu0 0
        %574 = vmatprep.mubr.bf16.mxu0 0
        %575 = vmatmul.mubr.bf16.gmra.mrb[0].mxu0 %v528
        %v576 = vpop.f32.mrb[0].mxu0
        %v577 = vadd.f32 %v516, %v576
        %v578 = vpop.f32.mrb[0].mxu0
        %v579 = vpop.f32.mrb[0].mxu0
        %v580 = vadd.f32 %v516, %v579
        %v581 = vpop.f32.mrb[0].mxu0
        %582 = vmatprep.mubr.bf16.mxu0 0
        %583 = vmatmul.mubr.bf16.gmra.mrb[0].mxu0 %v531
        %v584 = vpop.f32.mrb[0].mxu0
        %v585 = vadd.f32 %v516, %v584
        %v586 = vpop.f32.mrb[0].mxu0
        %v587 = vpop.f32.mrb[0].mxu0
        %v588 = vadd.f32 %v516, %v587
        %v589 = vpop.f32.mrb[0].mxu0
        %590 = vmatprep.mubr.bf16.mxu0 0
        %591 = vmatmul.mubr.bf16.gmra.mrb[0].mxu0 %v534
        %v592 = vpop.f32.mrb[0].mxu0
        %v593 = vadd.f32 %v516, %v592
        %v594 = vpop.f32.mrb[0].mxu0
        %v595 = vpop.f32.mrb[0].mxu0
        %v596 = vadd.f32 %v516, %v595
        %v597 = vpop.f32.mrb[0].mxu0
        %598 = vmatprep.mubr.bf16.mxu0 0
        %599 = vmatmul.mubr.bf16.gmra.mrb[0].mxu0 %v537
        %v600 = vpop.f32.mrb[0].mxu0
        %v601 = vadd.f32 %v516, %v600
        %v602 = vpop.f32.mrb[0].mxu0
        %v603 = vpop.f32.mrb[0].mxu0
        %v604 = vadd.f32 %v516, %v603
        %v605 = vpop.f32.mrb[0].mxu0
        %606 = vdwg.mxu0
        %607 = vst [vmem:[%s272] sm:$0xff] %v577
        %608 = vst [vmem:[%s272 + $0x8] sm:$0xff] %v580
        %609 = vst [vmem:[%s272 + $0x10] sm:$0xff] %v585
        %610 = vst [vmem:[%s272 + $0x18] sm:$0xff] %v588
        %611 = vst [vmem:[%s272 + $0x20] sm:$0xff] %v593
        %612 = vst [vmem:[%s272 + $0x28] sm:$0xff] %v596
        %613 = vst [vmem:[%s272 + $0x30] sm:$0xff] %v601
        %614 = vst [vmem:[%s272 + $0x38] sm:$0xff] %v604
        %s615 = sand.u32 %s181, 1
        %s616 = scalar_lea.sflag [#allocation3], %s615
        %s617 = sand.u32 %s181, 1
        %s618 = smul.addr %s617, 64
        %s619 = scalar_lea.vmem [#allocation2], %s618
        // Predicated region
        $region49: #{tpu_custom_call.1} parent=47 // pred_check
          %p620 = pneg %p191
        $region50: #{tpu_custom_call.1} parent=47 // pred_check_branch
          %622 = sbr.rel (%p620) target = $region52
        $region51: #{tpu_custom_call.1} parent=47 // pred_region
          %s623 = smul.u32 8, %s21
          %s625 = ssub.s32 1024, 1024
          %626 = vsyncadd %s616, %s625
          %s627 = smul.addr %s623, 128
          %s628 = scalar_lea.hbm %s7, %s627
          %s629 = sshll.u32 %s619, 4
          %s630 = int_to_ptr.vmem [resolvable:$true] %s629
          %635 = dma.vmem_to_hbm [thread:$0]  %s630, 1024, %s628, %s616, 128, 128, 8
        $region52: #{tpu_custom_call.1} parent=47 // pred_fallthru
          _
      $region48: #{tpu_custom_call.1} parent=5 // pred_fallthru
        _
      %p636 = scmp.le.s32.totalorder 2, %s16
      // Predicated region
      $region53: #{tpu_custom_call.1} parent=5 // pred_check
        %p637 = pneg %p636
      $region54: #{tpu_custom_call.1} parent=5 // pred_check_branch
        %639 = sbr.rel (%p637) target = $region56
      $region55: #{tpu_custom_call.1} parent=5 // pred_region
        %s640 = ssub.s32 %s16, 2
        // Predicated region
        $region57: #{tpu_custom_call.1} parent=55 // pred_check
          %p641 = pneg %p197
        $region58: #{tpu_custom_call.1} parent=55 // pred_check_branch
          %643 = sbr.rel (%p641) target = $region60
        $region59: #{tpu_custom_call.1} parent=55 // pred_region
          %s644 = sand.u32 %s182, 1
          %s645 = scalar_lea.sflag [#allocation3], %s644
          %s646 = sand.u32 %s182, 1
          %s647 = smul.addr %s646, 64
          %s648 = scalar_lea.vmem [#allocation2], %s647
          %649 = dma.done %s645, 1024
        $region60: #{tpu_custom_call.1} parent=55 // pred_fallthru
          _
      $region56: #{tpu_custom_call.1} parent=5 // pred_fallthru
        _
    $region6: #{tpu_custom_call.1} parent=1 // loop_footer
      %s20 = sadd.s32 1, %s16
    $region7: #{tpu_custom_call.1} parent=1 // loop_footer_branch
      %15 = sbr.rel target = $region3
    $region8: #{tpu_custom_call.1} parent=1 // loop_exit
      _
    %650 = vsyncpa [#allocation3], 1
    %s651 = scalar_lea.sflag [#allocation3], 1
    %652 = vsyncpa %s651, 1

</llo_original>
